<compile_context>
chip_gen: v5e
topology: v5e:2x2
jax: 0.10.0
libtpu: 0.0.40
codegen_flags: <defaults>
</compile_context>

<pallas_src>
import functools

import jax
import jax.numpy as jnp
from jax.experimental import pallas as pl
from jax.experimental.pallas import tpu as pltpu

_CLIP = 31.0
_LANES = 128
_SUBLANES = 8


# --------------------------------------------------------------------------
# chip / layout / tiling helpers
# --------------------------------------------------------------------------
def _chip_config():
    """Generation-aware block cap, scoped-VMEM limit and reduce-pass split."""
    kind = ""
    try:
        kind = jax.devices()[0].device_kind.lower()
    except Exception:
        pass
    if "v5 lite" in kind or "v5e" in kind or "v5lite" in kind:
        # v5e: 16 MiB default scoped VMEM -> modest blocks, raise the limit a bit.
        return dict(block_cap=int(3.5 * (1 << 20)), vmem_limit=32 << 20, partials=1)
    if "v7" in kind or "tpu7" in kind:
        # v7x: 64 MiB physical VMEM per TC, 2 TCs -> split the reduce pass.
        return dict(block_cap=6 << 20, vmem_limit=44 << 20, partials=2)
    if "v6" in kind or "trillium" in kind:
        return dict(block_cap=7 << 20, vmem_limit=56 << 20, partials=1)
    return dict(block_cap=4 << 20, vmem_limit=32 << 20, partials=1)


def _pick_layout(n, h, per_feature):
    """Lane-dense 2-D view of x using *free reshapes only* (no copies).

    Returns (rows, cols, fold):
      fold == 0 -> flattened view (global scaling only)
      fold == 1 -> natural (N, H) view
      fold  > 1 -> (N/fold, fold*H) view; per-feature max folded over groups
    """
    if h % _LANES == 0:
        return n, h, 1
    if per_feature:
        if _LANES % h == 0:
            fold = _LANES // h
            if n % fold == 0:
                return n // fold, fold * h, fold
        return n, h, 1                      # ragged N: natural layout, no copy
    total = n * h
    for cols in (1024, 512, 256, _LANES):
        if total % cols == 0:
            return total // cols, cols, 0
    return n, h, 1


def _choose_tile_rows(rows, cols, block_cap_bytes, target_rows):
    """Rows per block: multiple of 8, ~<= block cap (f32 working size), or full."""
    cap = max(_SUBLANES,
              (block_cap_bytes // max(1, cols * 4)) // _SUBLANES * _SUBLANES)
    tn = max(_SUBLANES, (min(int(target_rows), cap) // _SUBLANES) * _SUBLANES)
    return rows if rows <= tn else tn


def _cast_out(res_f32, out_dtype):
    if jnp.issubdtype(out_dtype, jnp.integer):
        res_f32 = res_f32.astype(jnp.int32)     # f32 -> i32 -> narrow int
    return res_f32.astype(out_dtype)


# --------------------------------------------------------------------------
# kernels
# --------------------------------------------------------------------------
def _fused_kernel(x_ref, o_ref, w_ref, *, max_out, global_max, fold, features):
    """Single-block path: abs-max reduce + scale + trunc + clamp in one kernel."""
    x = x_ref[...].astype(jnp.float32)
    max_abs = jnp.max(jnp.abs(x), axis=0, keepdims=True)           # (1, cols)
    if global_max:
        max_abs = jnp.full_like(max_abs, jnp.max(max_abs))
    elif fold > 1:
        # lanes carry `fold` copies of the feature axis; fold with XLU lane rolls
        acc = max_abs
        for s in range(1, fold):
            acc = jnp.maximum(acc, pltpu.roll(max_abs, shift=s * features, axis=1))
        max_abs = acc
    max_abs = jnp.where(max_abs == 0.0, jnp.float32(max_out), max_abs)
    # exact divide on purpose: trunc() downstream is boundary-sensitive.
    w = jnp.float32(max_out) / max_abs
    w_ref[...] = w
    res = jnp.clip(jnp.trunc(x * w), -_CLIP, _CLIP)
    o_ref[...] = _cast_out(res, o_ref.dtype)


def _absmax_kernel(x_ref, p_ref, *, tile_rows, rows, tiles_per_partial, masked):
    """Pass 1: per-lane running max(|x|) into a resident (8, cols) partial block."""
    i = pl.program_id(1)

    @pl.when(i == 0)
    def _init():
        p_ref[...] = jnp.zeros_like(p_ref)

    a = jnp.abs(x_ref[...].astype(jnp.float32))
    if masked:
        # mask rows beyond the logical array (ragged last tile / clamped
        # overflow tiles of the multi-partial split) — no jnp.pad needed.
        row0 = (pl.program_id(0) * tiles_per_partial + i) * tile_rows
        rid = row0 + jax.lax.broadcasted_iota(jnp.int32, a.shape, 0)
        a = jnp.where(rid < rows, a, 0.0)
    p_ref[...] = jnp.maximum(p_ref[...], jnp.max(a, axis=0, keepdims=True))


def _scale_kernel(w_ref, x_ref, o_ref):
    """Pass 2: res = clamp(trunc(x * weight), -31, 31).

    Ragged tail rows need no mask: Pallas drops out-of-bounds output writes, and
    the garbage input rows only feed those dropped outputs.
    """
    x = x_ref[...].astype(jnp.float32)
    res = jnp.clip(jnp.trunc(x * w_ref[...]), -_CLIP, _CLIP)
    o_ref[...] = _cast_out(res, o_ref.dtype)


# --------------------------------------------------------------------------
# functional forward (jit-safe, no side effects)
# --------------------------------------------------------------------------
def fixed_range_scaling(x, max_out, *, per_feature=False, out_dtype=None,
                        tile_rows=2048, fused_max_bytes=4 << 20,
                        reduce_partials=None):
    """Pure-functional forward. Returns (res, weight) with weight of shape (H,)."""
    assert x.ndim == 2, "this kernel implements the (N, H) case of the (N, *, H) contract"
    n, h = x.shape
    out_dtype = jnp.dtype(out_dtype) if out_dtype is not None else x.dtype
    max_out_f = float(max_out)
    cfg = _chip_config()

    rows, cols, fold = _pick_layout(n, h, per_feature)
    x2 = x if (rows, cols) == (n, h) else x.reshape(rows, cols)   # free reshape
    global_max = not per_feature

    # ---------------- fused single-block fast path -------------------------
    if rows * cols * 4 <= fused_max_bytes:
        kern = functools.partial(_fused_kernel, max_out=max_out_f,
                                 global_max=global_max, fold=fold, features=h)
        out2, w_row = pl.pallas_call(
            kern,
            grid=(1,),
            out_shape=(jax.ShapeDtypeStruct((rows, cols), out_dtype),
                       jax.ShapeDtypeStruct((1, cols), jnp.float32)),
            in_specs=[pl.BlockSpec((rows, cols), lambda i: (0, 0))],
            out_specs=(pl.BlockSpec((rows, cols), lambda i: (0, 0)),
                       pl.BlockSpec((1, cols), lambda i: (0, 0))),
            compiler_params=pltpu.CompilerParams(
                dimension_semantics=("arbitrary",),
                vmem_limit_bytes=cfg["vmem_limit"]),
        )(x2)
        if per_feature:
            weight = w_row[0, :h]
        else:
            weight = jnp.full((h,), w_row[0, 0], jnp.float32)
        res = out2 if (rows, cols) == (n, h) else out2.reshape(n, h)
        return res, weight

    # ---------------- tiled two-pass path -----------------------------------
    itemsize = jnp.dtype(x.dtype).itemsize
    tn = _choose_tile_rows(rows, cols, cfg["block_cap"], tile_rows)
    n_tiles = pl.cdiv(rows, tn)
    partials = cfg["partials"] if reduce_partials is None else int(reduce_partials)
    P = max(1, min(partials, n_tiles))
    T = pl.cdiv(n_tiles, P)
    need_clamp = P * T > n_tiles
    masked = need_clamp or (rows % tn != 0)

    if need_clamp:
        # overflow steps re-read the last block (cheap) and are fully masked
        x_map1 = lambda p, i: (jnp.minimum(p * T + i, n_tiles - 1), 0)
    else:
        x_map1 = lambda p, i: (p * T + i, 0)

    # pass 1: per-lane |x| max -> (P*8, cols) partial rows (8 identical rows / partial)
    reduce_kern = functools.partial(_absmax_kernel, tile_rows=tn, rows=rows,
                                    tiles_per_partial=T, masked=masked)
    partial_rows = pl.pallas_call(
        reduce_kern,
        grid=(P, T),
        out_shape=jax.ShapeDtypeStruct((P * _SUBLANES, cols), jnp.float32),
        in_specs=[pl.BlockSpec((tn, cols), x_map1)],
        out_specs=pl.BlockSpec((_SUBLANES, cols), lambda p, i: (p, 0)),
        compiler_params=pltpu.CompilerParams(
            dimension_semantics=("parallel", "arbitrary"),
            vmem_limit_bytes=cfg["vmem_limit"]),
        cost_estimate=pl.CostEstimate(
            flops=2 * rows * cols, transcendentals=0,
            bytes_accessed=rows * cols * itemsize + 4 * P * _SUBLANES * cols),
    )(x2)

    # finalize (tiny: <= P*8 x cols elements) stays in plain XLA
    lane_max = jnp.max(partial_rows, axis=0)                      # (cols,)
    if global_max:
        m = jnp.max(lane_max)
        m = jnp.where(m == 0.0, max_out_f, m)
        weight = jnp.full((h,), max_out_f / m, jnp.float32)
        w_row = jnp.full((1, cols), max_out_f / m, jnp.float32)
    else:
        feat_max = (jnp.max(lane_max.reshape(fold, h), axis=0)
                    if fold > 1 else lane_max)
        feat_max = jnp.where(feat_max == 0.0, max_out_f, feat_max)
        weight = max_out_f / feat_max                             # (h,)
        w_row = (jnp.tile(weight, fold) if fold > 1 else weight)[None, :]

    # pass 2: scale + trunc-toward-zero + clamp
    out2 = pl.pallas_call(
        _scale_kernel,
        grid=(n_tiles,),
        out_shape=jax.ShapeDtypeStruct((rows, cols), out_dtype),
        in_specs=[pl.BlockSpec((1, cols), lambda i: (0, 0)),      # weight (resident)
                  pl.BlockSpec((tn, cols), lambda i: (i, 0))],    # x tile
        out_specs=pl.BlockSpec((tn, cols), lambda i: (i, 0)),
        compiler_params=pltpu.CompilerParams(
            dimension_semantics=("parallel",),
            vmem_limit_bytes=cfg["vmem_limit"]),
        cost_estimate=pl.CostEstimate(
            flops=3 * rows * cols, transcendentals=0,
            bytes_accessed=rows * cols * (itemsize + jnp.dtype(out_dtype).itemsize)
            + 4 * cols),
    )(w_row, x2)

    res = out2 if (rows, cols) == (n, h) else out2.reshape(n, h)
    return res, weight


# --------------------------------------------------------------------------
# module-style wrapper
# --------------------------------------------------------------------------
def _is_tracer(v):
    try:
        return isinstance(v, jax.core.Tracer)
    except Exception:
        return False


class FixedRangeScalingPallas:
    """JAX/Pallas counterpart of the PyTorch FixedRangeScaling module.

    Prefer the pure `fixed_range_scaling` function under jax.jit; this class is a
    convenience wrapper and only updates `.weight` with concrete (non-traced)
    values, so it never leaks tracers.
    """

    CLIP = _CLIP

    def __init__(self, features, max_out, per_feature=False, dtype=jnp.float32,
                 tile_rows=2048, fused_max_bytes=4 << 20, out_dtype=None,
                 reduce_partials=None):
        self.features = features
        self.max_out = max_out
        self.per_feature = per_feature
        self.tile_rows = tile_rows
        self.fused_max_bytes = fused_max_bytes
        self.out_dtype = out_dtype
        self.reduce_partials = reduce_partials
        # reset_parameters(): init.ones_(weight); overwritten every forward.
        self.weight = jnp.ones((features,), dtype=dtype)

    def __call__(self, x):
        assert x.shape[-1] == self.features
        # TODO(synk): torch's host-side print('clamping', ...) overflow logging is
        # intentionally not reproduced (pure logging, no numerical effect).
        res, w = fixed_range_scaling(
            x, self.max_out, per_feature=self.per_feature,
            out_dtype=self.out_dtype, tile_rows=self.tile_rows,
            fused_max_bytes=self.fused_max_bytes,
            reduce_partials=self.reduce_partials)
        if not _is_tracer(w):
            self.weight = w.astype(self.weight.dtype)
        return res


# --------------------------------------------------------------------------
# pure-JAX reference + checks
# --------------------------------------------------------------------------
def _reference(x, max_out, per_feature, out_dtype=None):
    xf = x.astype(jnp.float32)
    max_abs = jnp.max(jnp.abs(xf), axis=0)
    if not per_feature:
        max_abs = jnp.full_like(max_abs, jnp.max(max_abs))
    max_abs = jnp.where(max_abs == 0.0, float(max_out), max_abs)
    res = jnp.trunc(xf * (max_out / max_abs))
    res = jnp.clip(res, -_CLIP, _CLIP)
    return res.astype(out_dtype if out_dtype is not None else x.dtype)


def _check(out, x, max_out, per_feature, out_dtype=None):
    ref = _reference(x, max_out, per_feature, out_dtype)
    of, rf = out.astype(jnp.float32), ref.astype(jnp.float32)
    if bool(jnp.array_equal(of, rf)):
        return
    # A 1-ULP difference in the weight divide can flip trunc() exactly at integer
    # boundaries; tolerate an off-by-one there and nowhere else.
    xf = x.astype(jnp.float32)
    max_abs = jnp.max(jnp.abs(xf), axis=0)
    if not per_feature:
        max_abs = jnp.full_like(max_abs, jnp.max(max_abs))
    max_abs = jnp.where(max_abs == 0.0, float(max_out), max_abs)
    prod = xf * (max_out / max_abs)
    near_int = jnp.abs(prod - jnp.round(prod)) < 1e-4
    diff = jnp.abs(of - rf)
    assert bool(jnp.all((diff == 0) | ((diff <= 1) & near_int))), "kernel mismatch"


# --------------------------------------------------------------------------
# demo / self-test
# --------------------------------------------------------------------------
if __name__ == "__main__":
    MAX_OUT = 31
    key = jax.random.PRNGKey(0)

    # (N, H, per_feature, module kwargs) — small shapes; some force the tiled path
    configs = [
        (8,   32, False, dict()),                                   # fused, global flatten (lane-dense)
        (8,   32, True,  dict()),                                   # fused, per-feature lane-folded (k=4)
        (21,  32, True,  dict()),                                   # fused, per-feature fallback (N % 4 != 0)
        (64,  32, True,  dict(fused_max_bytes=0, tile_rows=8)),     # tiled per-feature, fold=4, 2 tiles
        (72,  32, True,  dict(fused_max_bytes=0, tile_rows=8)),     # tiled, ragged last tile (masked)
        (21,  32, True,  dict(fused_max_bytes=0, tile_rows=8)),     # tiled natural layout, ragged
        (10,  24, False, dict(fused_max_bytes=0, tile_rows=8)),     # tiled global fallback (240 % 128 != 0)
        (512, 32, False, dict(fused_max_bytes=0, tile_rows=8)),     # tiled global flatten, multi-tile
        (768, 32, False, dict(fused_max_bytes=0, tile_rows=8,
                              reduce_partials=2)),                  # split reduce + clamped overflow tile
    ]

    for idx, (n, h, per_feature, kw) in enumerate(configs):
        k = jax.random.fold_in(key, idx)
        x = jax.random.normal(k, (n, h), dtype=jnp.float32) * 5.0
        x = x.at[:, 3].set(0.0)            # all-zero feature -> max_abs == 0 branch
        mod = FixedRangeScalingPallas(h, MAX_OUT, per_feature=per_feature, **kw)
        out = jax.block_until_ready(mod(x))
        assert out.shape == x.shape and out.dtype == x.dtype
        _check(out, x, MAX_OUT, per_feature)
        assert float(jnp.max(jnp.abs(out.astype(jnp.float32)))) <= 31.0
        # weight sanity vs. reference
        ma = jnp.max(jnp.abs(x), axis=0)
        if not per_feature:
            ma = jnp.full_like(ma, jnp.max(ma))
        ma = jnp.where(ma == 0.0, float(MAX_OUT), ma)
        assert jnp.allclose(mod.weight, MAX_OUT / ma), f"weight mismatch {(n, h, per_feature)}"

    # narrower output dtype: values are integers in [-31, 31] -> int8 is exact
    x = jax.random.normal(jax.random.fold_in(key, 100), (16, 32), jnp.float32) * 7.0
    mod = FixedRangeScalingPallas(32, MAX_OUT, per_feature=False, out_dtype=jnp.int8)
    out = jax.block_until_ready(mod(x))
    assert out.dtype == jnp.int8
    _check(out, x, MAX_OUT, False, jnp.int8)

    # bf16 input (compute stays f32 in-kernel; matches the documented policy)
    xb = (jax.random.normal(jax.random.fold_in(key, 101), (32, 32), jnp.float32) * 5.0
          ).astype(jnp.bfloat16)
    mod = FixedRangeScalingPallas(32, MAX_OUT, per_feature=True)
    out = jax.block_until_ready(mod(xb))
    assert out.dtype == jnp.bfloat16
    _check(out, xb, MAX_OUT, True)

    # all-zero input: global max == 0 -> weight falls back to 1, output all zeros
    zeros = jnp.zeros((8, 32), jnp.float32)
    mod = FixedRangeScalingPallas(32, MAX_OUT, per_feature=False)
    out = jax.block_until_ready(mod(zeros))
    assert jnp.array_equal(out, _reference(zeros, MAX_OUT, False))
    assert jnp.allclose(mod.weight, 1.0)

    # the functional core is jit-safe (no weight side effect inside jit)
    fjit = jax.jit(functools.partial(fixed_range_scaling, max_out=MAX_OUT,
                                     per_feature=True))
    xj = jax.random.normal(jax.random.fold_in(key, 102), (24, 32), jnp.float32) * 3.0
    res, w = jax.block_until_ready(fjit(xj))
    _check(res, xj, MAX_OUT, True)

    print("KERNEL_OK")
</pallas_src>

<mosaic_0001>
module attributes {stable_mosaic.version = 11 : i64} {
  func.func @_fused_kernel(%arg0: i32, %arg1: memref<1x256xf32, #tpu.memory_space<vmem>>, %arg2: memref<1x256xf32, #tpu.memory_space<vmem>>, %arg3: memref<1x256xf32, #tpu.memory_space<vmem>>) attributes {dimension_semantics = [#tpu.dimension_semantics<arbitrary>], iteration_bounds = array<i64: 1>, scalar_prefetch = 0 : i64, scratch_operands = 0 : i64, tpu.core_type = #tpu.core_type<tc>, window_params = [{pipeline_mode = #tpu.pipeline_mode<synchronous>, transform_indices = @transform_0, window_bounds = array<i64: 1, 256>}, {pipeline_mode = #tpu.pipeline_mode<synchronous>, transform_indices = @transform_1, window_bounds = array<i64: 1, 256>}, {pipeline_mode = #tpu.pipeline_mode<synchronous>, transform_indices = @transform_2, window_bounds = array<i64: 1, 256>}]} {
    %c0 = arith.constant 0 : index
    %c0_0 = arith.constant 0 : index
    %0 = vector.load %arg1[%c0, %c0_0] : memref<1x256xf32, #tpu.memory_space<vmem>>, vector<1x256xf32>
    %1 = math.absf %0 : vector<1x256xf32>
    %cst = arith.constant dense<0xFF800000> : vector<256xf32>
    %2 = vector.multi_reduction <maximumf>, %1, %cst [0] : vector<1x256xf32> to vector<256xf32>
    %3 = vector.shape_cast %2 : vector<256xf32> to vector<1x256xf32>
    %4 = vector.shape_cast %3 : vector<1x256xf32> to vector<1x1x256xf32>
    %cst_1 = arith.constant dense<0xFF800000> : vector<1xf32>
    %5 = vector.multi_reduction <maximumf>, %4, %cst_1 [1, 2] : vector<1x1x256xf32> to vector<1xf32>
    %6 = vector.shape_cast %5 : vector<1xf32> to vector<1x1x1xf32>
    %7 = vector.extract %6[0, 0, 0] : f32 from vector<1x1x1xf32>
    %8 = vector.broadcast %7 : f32 to vector<1x256xf32>
    %cst_2 = arith.constant 0.000000e+00 : f32
    %9 = vector.broadcast %cst_2 : f32 to vector<1x256xf32>
    %10 = arith.cmpf oeq, %8, %9 : vector<1x256xf32>
    %cst_3 = arith.constant 3.100000e+01 : f32
    %11 = vector.broadcast %cst_3 : f32 to vector<1x256xf32>
    %12 = arith.select %10, %11, %8 : vector<1x256xi1>, vector<1x256xf32>
    %cst_4 = arith.constant 3.100000e+01 : f32
    %13 = vector.broadcast %cst_4 : f32 to vector<1x256xf32>
    %14 = arith.divf %13, %12 : vector<1x256xf32>
    %c0_5 = arith.constant 0 : index
    %c0_6 = arith.constant 0 : index
    %15 = vector.load %arg3[%c0_5, %c0_6] : memref<1x256xf32, #tpu.memory_space<vmem>>, vector<1x256xf32>
    tpu.vector_store %arg3[%c0_5, %c0_6], %14 {strides = array<i32>} : memref<1x256xf32, #tpu.memory_space<vmem>>, vector<1x256xf32>,
    %16 = arith.mulf %0, %14 : vector<1x256xf32>
    %cst_7 = arith.constant 0.000000e+00 : f32
    %17 = vector.broadcast %cst_7 : f32 to vector<1x256xf32>
    %18 = arith.cmpf olt, %16, %17 : vector<1x256xf32>
    %19 = math.ceil %16 : vector<1x256xf32>
    %20 = math.floor %16 : vector<1x256xf32>
    %21 = arith.select %18, %19, %20 : vector<1x256xi1>, vector<1x256xf32>
    %cst_8 = arith.constant -3.100000e+01 : f32
    %cst_9 = arith.constant 3.100000e+01 : f32
    %22 = vector.broadcast %cst_8 : f32 to vector<1x256xf32>
    %23 = arith.maximumf %22, %21 : vector<1x256xf32>
    %24 = vector.broadcast %cst_9 : f32 to vector<1x256xf32>
    %25 = arith.minimumf %24, %23 : vector<1x256xf32>
    %c0_10 = arith.constant 0 : index
    %c0_11 = arith.constant 0 : index
    %26 = vector.load %arg2[%c0_10, %c0_11] : memref<1x256xf32, #tpu.memory_space<vmem>>, vector<1x256xf32>
    tpu.vector_store %arg2[%c0_10, %c0_11], %25 {strides = array<i32>} : memref<1x256xf32, #tpu.memory_space<vmem>>, vector<1x256xf32>,
    return
  }
  func.func @transform_0(%arg0: i32) -> (i32, i32) {
    %c0_i32 = arith.constant 0 : i32
    %c0_i32_0 = arith.constant 0 : i32
    %c0_i32_1 = arith.constant 0 : i32
    return %c0_i32, %c0_i32_0 : i32, i32
  }
  func.func @transform_1(%arg0: i32) -> (i32, i32) {
    %c0_i32 = arith.constant 0 : i32
    %c0_i32_0 = arith.constant 0 : i32
    %c0_i32_1 = arith.constant 0 : i32
    return %c0_i32, %c0_i32_0 : i32, i32
  }
  func.func @transform_2(%arg0: i32) -> (i32, i32) {
    %c0_i32 = arith.constant 0 : i32
    %c0_i32_0 = arith.constant 0 : i32
    %c0_i32_1 = arith.constant 0 : i32
    return %c0_i32, %c0_i32_0 : i32, i32
  }
}

</mosaic_0001>

<llo_original>
// kernel: tpu_custom_call.1
$region0: #{tpu_custom_call.1}
  #allocation0 [shape = 'u32[]', space=smem, size = 0x4, offset = 0x4, fixed_abs, tag = 'smem constant byte address 0x4 - core index']
  #allocation1 [shape = 'u32[72,128]{1,0:T(1,128)}', space=vmem, size = 0x9000, scoped, tag = 'internal scratch']
  %s0 = inlined_call_operand.hbm [shape: f32[1,256], index: 0, kind: input, shape index: {}]
  %s1 = inlined_call_operand.hbm [shape: f32[1,256], index: 1, kind: output, shape index: {0}]
  %s2 = inlined_call_operand.hbm [shape: f32[1,256], index: 2, kind: output, shape index: {1}]
  %3 = xla_tuple %s1, %s2
  %s4 = sld [smem:[#allocation0]]
  $region26: #{tpu_custom_call.1} parent=0
    _
  %s6 = ssub.s32 1, %s4
  %s7 = scalar_select 0, %s6, %s4
  $region1: #{tpu_custom_call.1} parent=0
    #allocation2 [shape = 'u8[1024]{0}', space=vmem, size = 0x400, scoped, tag = 'input window, operand 0, single buffered']
    #allocation3 [shape = 's32[1]{0}', space=sflag, size = 0x4, scoped, tag = 'scoped memory for tpu_custom_call.1']
    #allocation4 [shape = 's32[1]{0}', space=sflag, size = 0x4, scoped, tag = 'scoped memory for tpu_custom_call.1']
    #allocation5 [shape = 'u8[1024]{0}', space=vmem, size = 0x400, scoped, tag = 'output window, operand 0, single buffered']
    #allocation6 [shape = 'u8[1024]{0}', space=vmem, size = 0x400, scoped, tag = 'output window, operand 1, single buffered']
    #allocation7 [shape = 's32[1]{0}', space=sflag, size = 0x4, scoped, tag = 'scoped memory for tpu_custom_call.1']
    %8 = vsyncpa [#allocation3], 0
    %9 = vsyncpa [#allocation4], 0
    %10 = vsyncpa [#allocation7], 0
    // Predicated region
    $region2: #{tpu_custom_call.1} parent=1 // pred_check
      _
    $region3: #{tpu_custom_call.1} parent=1 // pred_check_branch
      %12 = sbr.rel (0) target = $region5
    $region4: #{tpu_custom_call.1} parent=1 // pred_region
      %14 = vsyncadd [#allocation3], 0
      %s16 = sshll.u32 %s0, 4
      %s17 = int_to_ptr.hbm [resolvable:$true] %s16
      %s18 = sshll.u32 [#allocation2], 4
      %s19 = int_to_ptr.vmem [resolvable:$true] %s18
      %21 = dma.hbm_to_vmem [thread:$0]  %s17, 32, %s19, [#allocation3]
    $region5: #{tpu_custom_call.1} parent=1 // pred_fallthru
      _
    // Predicated region
    $region6: #{tpu_custom_call.1} parent=1 // pred_check
      _
    $region7: #{tpu_custom_call.1} parent=1 // pred_check_branch
      %23 = sbr.rel (0) target = $region9
    $region8: #{tpu_custom_call.1} parent=1 // pred_region
      %25 = dma.done [#allocation3], 32
    $region9: #{tpu_custom_call.1} parent=1 // pred_fallthru
      _
    %v26 = vld [vmem:[#allocation2] sm:$0x3]
    %v27 = vand.u32 2147483647, %v26
    %v29 = vperm.slane %v27, 0
    %v30 = vperm.slane %v27, 1
    %vm33 = vcmask 1040384
    %v34 = vsel %vm33, %v29, -inf
    %v35 = vsel %vm33, %v30, -inf
    %v36 = vmax.f32 %v34, %v35
    %37 = vmax.xlane.f32.xlu0 %v36
    %v38 = vpop.xlane.xlu0 %37
    %v39 = vrot.slane %v38, 4
    %v40 = vmax.f32 %v38, %v39
    %v41 = vrot.slane %v40, 2
    %v42 = vmax.f32 %v40, %v41
    %v43 = vrot.slane %v42, 1
    %v44 = vmax.f32 %v42, %v43
    %s45 = vtos %v44
    %v46 = vstv %s45
    %vm47 = vcmp.eq.f32.partialorder %v46, 0.0
    %v48 = vsel %vm47, 31.0, %v46
    %v49 = vrcp.pop %v48
    %v50 = vmul.f32 %v48, %v49
    %v51 = vsub.f32 1.0, %v50
    %v52 = vmul.f32 %v49, %v51
    %v53 = vadd.f32 %v49, %v52
    %vm54 = vweird.f32 %v48
    %vm55 = vweird.f32 %v49
    %vm56 = vmor %vm54, %vm55
    %v57 = vsel %vm56, %v49, %v53
    %v58 = vand.u32 2147483647, %v48
    %vm59 = vcmp.eq.f32.partialorder %v58, 8.507059e+37
    %v60 = vand.u32 %v48, 2147483648
    %v61 = vor.u32 1.1754944e-38, %v60
    %v62 = vsel %vm59, %v61, %v57
    %v63 = vmul.f32 31.0, %v62
    %v64 = vlaneseq
    %vm65 = vcmp.ge.s32.totalorder %v64, 0
    %vm66 = vcmp.lt.s32.totalorder %v64, 256
    %vm67 = vmand %vm65, %vm66
    %68 = vst.msk [vmem:[#allocation6] sm:$0x3] %vm67, %v63
    %v69 = vmul.f32 %v26, %v63
    %vm70 = vcmp.lt.f32.partialorder %v69, 0.0
    %v71 = vceil.f32 %v69
    %v72 = vfloor.f32 %v69
    %v73 = vsel %vm70, %v71, %v72
    %v74 = vmax.f32 %v73, -31.0
    %v75 = vmin.f32 %v74, 31.0
    %76 = vst.msk [vmem:[#allocation5] sm:$0x3] %vm67, %v75
    // Predicated region
    $region10: #{tpu_custom_call.1} parent=1 // pred_check
      _
    $region11: #{tpu_custom_call.1} parent=1 // pred_check_branch
      %78 = sbr.rel (0) target = $region13
    $region12: #{tpu_custom_call.1} parent=1 // pred_region
      %80 = vsyncadd [#allocation4], 0
      %s82 = sshll.u32 [#allocation5], 4
      %s83 = int_to_ptr.vmem [resolvable:$true] %s82
      %s84 = sshll.u32 %s1, 4
      %s85 = int_to_ptr.hbm [resolvable:$true] %s84
      %87 = dma.vmem_to_hbm [thread:$0]  %s83, 32, %s85, [#allocation4]
    $region13: #{tpu_custom_call.1} parent=1 // pred_fallthru
      _
    // Predicated region
    $region14: #{tpu_custom_call.1} parent=1 // pred_check
      _
    $region15: #{tpu_custom_call.1} parent=1 // pred_check_branch
      %89 = sbr.rel (0) target = $region17
    $region16: #{tpu_custom_call.1} parent=1 // pred_region
      %91 = vsyncadd [#allocation7], 0
      %s93 = sshll.u32 [#allocation6], 4
      %s94 = int_to_ptr.vmem [resolvable:$true] %s93
      %s95 = sshll.u32 %s2, 4
      %s96 = int_to_ptr.hbm [resolvable:$true] %s95
      %98 = dma.vmem_to_hbm [thread:$0]  %s94, 32, %s96, [#allocation7]
    $region17: #{tpu_custom_call.1} parent=1 // pred_fallthru
      _
    // Predicated region
    $region18: #{tpu_custom_call.1} parent=1 // pred_check
      _
    $region19: #{tpu_custom_call.1} parent=1 // pred_check_branch
      %100 = sbr.rel (0) target = $region21
    $region20: #{tpu_custom_call.1} parent=1 // pred_region
      %102 = dma.done [#allocation4], 32
    $region21: #{tpu_custom_call.1} parent=1 // pred_fallthru
      _
    // Predicated region
    $region22: #{tpu_custom_call.1} parent=1 // pred_check
      _
    $region23: #{tpu_custom_call.1} parent=1 // pred_check_branch
      %104 = sbr.rel (0) target = $region25
    $region24: #{tpu_custom_call.1} parent=1 // pred_region
      %106 = dma.done [#allocation7], 32
    $region25: #{tpu_custom_call.1} parent=1 // pred_fallthru
      _
    %107 = vsyncpa [#allocation3], 1
    %108 = vsyncpa [#allocation4], 1
    %109 = vsyncpa [#allocation7], 1

</llo_original>
